<compile_context>
chip_gen: v6e
topology: v6e:2x2x1
jax: 0.10.0
libtpu: 0.0.40
codegen_flags: <defaults>
</compile_context>

<pallas_src>
import functools

import jax
import jax.numpy as jnp
from jax.experimental import pallas as pl
from jax.experimental.pallas import tpu as pltpu


def _round_up(x, m):
    return ((x + m - 1) // m) * m


def _mix32(x):
    """lowbias32-style uint32 finalizer (bijective, good avalanche)."""
    x = x ^ (x >> 16)
    x = x * jnp.uint32(0x7FEB352D)
    x = x ^ (x >> 15)
    x = x * jnp.uint32(0x846CA68B)
    x = x ^ (x >> 16)
    return x


def _dropout_kernel(seed_ref, x_ref, o_ref, *, threshold_u32, scale):
    """One grid step = one (row_tile, sample) pair.

    seed_ref : SMEM int32[upsampling_num]   (scalar-prefetched per-sample seeds)
    x_ref    : VMEM (TILE_N, D) input tile  (resident across the sample axis)
    o_ref    : VMEM (1, TILE_N, D) output slice for (sample, row_tile)
    """
    j = pl.program_id(0)          # row-tile index (parallel axis)
    i = pl.program_id(1)          # sample / upsampling index (innermost)
    n, d = x_ref.shape

    # Well-mixed per-sample key (scalar).
    s = _mix32(seed_ref[i].astype(jnp.uint32) ^ jnp.uint32(0x9E3779B9))

    # Global element index: includes the row-tile offset, so tiles of the same
    # sample never repeat the mask pattern.
    row = jax.lax.broadcasted_iota(jnp.int32, (n, d), 0).astype(jnp.uint32)
    col = jax.lax.broadcasted_iota(jnp.int32, (n, d), 1).astype(jnp.uint32)
    row_off = (j * n).astype(jnp.uint32)
    ctr = (row + row_off) * jnp.uint32(d) + col

    # Counter-based stateless PRNG: pure uint32 VPU ops (no pltpu.prng_*),
    # lowers on TPU and in interpret mode alike.  Two mixing rounds.
    bits = _mix32(_mix32(ctr ^ s) + jnp.uint32(0x9E3779B9))

    # keep an element iff bits >= round(p * 2^32)   (probability 1 - p)
    keep = bits >= jnp.uint32(threshold_u32)

    xf = x_ref[...].astype(jnp.float32)
    out = jnp.where(keep, xf * jnp.float32(scale), jnp.float32(0.0))
    o_ref[0, :, :] = out.astype(o_ref.dtype)


def dropout_upsample(source_embedding, *, dropout_rate, upsampling_num, seed=0):
    """Pallas equivalent of Dropout(dropout_rate, upsampling_num).forward.

    Returns an array of shape (upsampling_num, *source_embedding.shape).
    """
    orig_shape = source_embedding.shape

    if dropout_rate <= 0.0:
        # nn.Dropout(p=0) is identity; just broadcast-stack.
        return jnp.broadcast_to(source_embedding[None],
                                (upsampling_num,) + orig_shape)
    if dropout_rate >= 1.0:
        # nn.Dropout(p=1) zeroes everything.
        return jnp.zeros((upsampling_num,) + orig_shape,
                         source_embedding.dtype)

    hidden = orig_shape[-1]
    x2d = source_embedding.reshape(-1, hidden)          # (N, D), D on lanes
    n_rows, d = x2d.shape
    itemsize = jnp.dtype(source_embedding.dtype).itemsize

    # Row tile: multiple of 8, <= 512 rows, and per-block bytes capped so the
    # resident input tile + double-buffered output tiles fit scoped VMEM on
    # every generation (v5e 16 MiB / v6e 32 MiB / v7x 32 MiB) with no flags.
    max_rows_by_vmem = max(8, (2 * 1024 * 1024) // max(1, d * itemsize))
    tile_n = min(512, _round_up(n_rows, 8), (max_rows_by_vmem // 8) * 8)
    tile_n = max(8, tile_n)
    num_row_tiles = pl.cdiv(n_rows, tile_n)

    threshold_u32 = min(int(round(dropout_rate * (2 ** 32))), 2 ** 32 - 1)
    scale = 1.0 / (1.0 - dropout_rate)

    # Distinct deterministic seed per upsampled copy (mixed further in-kernel).
    seeds = jnp.arange(upsampling_num, dtype=jnp.int32) + jnp.int32(seed)

    kernel = functools.partial(
        _dropout_kernel, threshold_u32=threshold_u32, scale=scale)

    out3d = pl.pallas_call(
        kernel,
        out_shape=jax.ShapeDtypeStruct((upsampling_num, n_rows, d),
                                       source_embedding.dtype),
        grid_spec=pltpu.PrefetchScalarGridSpec(
            num_scalar_prefetch=1,
            # sample axis innermost -> the input tile is read from HBM once
            # and stays VMEM-resident across all upsampling_num samples.
            grid=(num_row_tiles, upsampling_num),
            in_specs=[
                pl.BlockSpec((tile_n, d), lambda j, i, seeds: (j, 0)),
            ],
            out_specs=pl.BlockSpec((1, tile_n, d),
                                   lambda j, i, seeds: (i, j, 0)),
        ),
        compiler_params=pltpu.CompilerParams(
            # row tiles are independent (stateless per-element hash), so the
            # row axis can shard across v7x's two TensorCores; sample axis is
            # the inner streaming loop.
            dimension_semantics=("parallel", "arbitrary"),
        ),
    )(seeds, x2d)

    return out3d.reshape((upsampling_num,) + orig_shape)


if __name__ == "__main__":
    key = jax.random.PRNGKey(0)
    batch, seq, hidden = 2, 8, 128
    dropout_rate = 0.1
    upsampling_num = 4

    source_embedding = jax.random.normal(key, (batch, seq, hidden),
                                         dtype=jnp.float32)

    out = dropout_upsample(source_embedding,
                           dropout_rate=dropout_rate,
                           upsampling_num=upsampling_num,
                           seed=42)
    out = jax.block_until_ready(out)

    # Sanity checks: shape, and that surviving elements equal x / (1 - p).
    assert out.shape == (upsampling_num, batch, seq, hidden)
    scale = 1.0 / (1.0 - dropout_rate)
    expected = source_embedding[None] * scale
    mask_ok = jnp.all((out == 0) | (jnp.abs(out - expected) < 1e-4))
    assert bool(mask_ok)
    # Independent samples should not all share the same mask.
    assert bool(jnp.any((out[0] == 0) != (out[1] == 0)))
    # Drop fraction should be roughly p.
    drop_frac = float(jnp.mean((out == 0).astype(jnp.float32)))
    assert 0.02 < drop_frac < 0.3, drop_frac

    print("KERNEL_OK")
</pallas_src>

<mosaic_0001>
module attributes {stable_mosaic.version = 11 : i64} {
  func.func @_dropout_kernel(%arg0: i32, %arg1: i32, %arg2: memref<4xi32, #tpu.memory_space<smem>>, %arg3: memref<16x128xf32, #tpu.memory_space<vmem>>, %arg4: memref<1x16x128xf32, #tpu.memory_space<vmem>>) attributes {dimension_semantics = [#tpu.dimension_semantics<parallel>, #tpu.dimension_semantics<arbitrary>], iteration_bounds = array<i64: 1, 4>, scalar_prefetch = 1 : i64, scratch_operands = 0 : i64, tpu.core_type = #tpu.core_type<tc>, window_params = [{transform_indices = @transform_0, window_bounds = array<i64: 16, 128>}, {transform_indices = @transform_1, window_bounds = array<i64: 1, 16, 128>}]} {
    %0 = arith.index_cast %arg1 : i32 to index
    %1 = memref.load %arg2[%0] : memref<4xi32, #tpu.memory_space<smem>>
    %c-1640531527_i32 = arith.constant -1640531527 : i32
    %2 = arith.xori %1, %c-1640531527_i32 : i32
    %c16_i32 = arith.constant 16 : i32
    %3 = arith.shrui %2, %c16_i32 : i32
    %4 = arith.xori %2, %3 : i32
    %c2146121005_i32 = arith.constant 2146121005 : i32
    %5 = arith.muli %4, %c2146121005_i32 : i32
    %c15_i32 = arith.constant 15 : i32
    %6 = arith.shrui %5, %c15_i32 : i32
    %7 = arith.xori %5, %6 : i32
    %c-2073254261_i32 = arith.constant -2073254261 : i32
    %8 = arith.muli %7, %c-2073254261_i32 : i32
    %c16_i32_0 = arith.constant 16 : i32
    %9 = arith.shrui %8, %c16_i32_0 : i32
    %10 = arith.xori %8, %9 : i32
    %11 = tpu.iota {dimensions = array<i32: 0>} : vector<16x128xi32>
    %12 = tpu.iota {dimensions = array<i32: 1>} : vector<16x128xi32>
    %c16_i32_1 = arith.constant 16 : i32
    %13 = arith.muli %arg0, %c16_i32_1 : i32
    %14 = vector.broadcast %13 : i32 to vector<16x128xi32>
    %15 = arith.addi %11, %14 : vector<16x128xi32>
    %c128_i32 = arith.constant 128 : i32
    %16 = vector.broadcast %c128_i32 : i32 to vector<16x128xi32>
    %17 = arith.muli %15, %16 : vector<16x128xi32>
    %18 = arith.addi %17, %12 : vector<16x128xi32>
    %19 = vector.broadcast %10 : i32 to vector<16x128xi32>
    %20 = arith.xori %18, %19 : vector<16x128xi32>
    %c16_i32_2 = arith.constant 16 : i32
    %21 = vector.broadcast %c16_i32_2 : i32 to vector<16x128xi32>
    %22 = arith.shrui %20, %21 : vector<16x128xi32>
    %23 = arith.xori %20, %22 : vector<16x128xi32>
    %c2146121005_i32_3 = arith.constant 2146121005 : i32
    %24 = vector.broadcast %c2146121005_i32_3 : i32 to vector<16x128xi32>
    %25 = arith.muli %23, %24 : vector<16x128xi32>
    %c15_i32_4 = arith.constant 15 : i32
    %26 = vector.broadcast %c15_i32_4 : i32 to vector<16x128xi32>
    %27 = arith.shrui %25, %26 : vector<16x128xi32>
    %28 = arith.xori %25, %27 : vector<16x128xi32>
    %c-2073254261_i32_5 = arith.constant -2073254261 : i32
    %29 = vector.broadcast %c-2073254261_i32_5 : i32 to vector<16x128xi32>
    %30 = arith.muli %28, %29 : vector<16x128xi32>
    %c16_i32_6 = arith.constant 16 : i32
    %31 = vector.broadcast %c16_i32_6 : i32 to vector<16x128xi32>
    %32 = arith.shrui %30, %31 : vector<16x128xi32>
    %33 = arith.xori %30, %32 : vector<16x128xi32>
    %c-1640531527_i32_7 = arith.constant -1640531527 : i32
    %34 = vector.broadcast %c-1640531527_i32_7 : i32 to vector<16x128xi32>
    %35 = arith.addi %33, %34 : vector<16x128xi32>
    %c16_i32_8 = arith.constant 16 : i32
    %36 = vector.broadcast %c16_i32_8 : i32 to vector<16x128xi32>
    %37 = arith.shrui %35, %36 : vector<16x128xi32>
    %38 = arith.xori %35, %37 : vector<16x128xi32>
    %c2146121005_i32_9 = arith.constant 2146121005 : i32
    %39 = vector.broadcast %c2146121005_i32_9 : i32 to vector<16x128xi32>
    %40 = arith.muli %38, %39 : vector<16x128xi32>
    %c15_i32_10 = arith.constant 15 : i32
    %41 = vector.broadcast %c15_i32_10 : i32 to vector<16x128xi32>
    %42 = arith.shrui %40, %41 : vector<16x128xi32>
    %43 = arith.xori %40, %42 : vector<16x128xi32>
    %c-2073254261_i32_11 = arith.constant -2073254261 : i32
    %44 = vector.broadcast %c-2073254261_i32_11 : i32 to vector<16x128xi32>
    %45 = arith.muli %43, %44 : vector<16x128xi32>
    %c16_i32_12 = arith.constant 16 : i32
    %46 = vector.broadcast %c16_i32_12 : i32 to vector<16x128xi32>
    %47 = arith.shrui %45, %46 : vector<16x128xi32>
    %48 = arith.xori %45, %47 : vector<16x128xi32>
    %c429496730_i32 = arith.constant 429496730 : i32
    %49 = vector.broadcast %c429496730_i32 : i32 to vector<16x128xi32>
    %50 = arith.cmpi uge, %48, %49 : vector<16x128xi32>
    %c0 = arith.constant 0 : index
    %c0_13 = arith.constant 0 : index
    %51 = vector.load %arg3[%c0, %c0_13] : memref<16x128xf32, #tpu.memory_space<vmem>>, vector<16x128xf32>
    %cst = arith.constant 1.11111116 : f32
    %52 = vector.broadcast %cst : f32 to vector<16x128xf32>
    %53 = arith.mulf %51, %52 : vector<16x128xf32>
    %cst_14 = arith.constant 0.000000e+00 : f32
    %54 = vector.broadcast %cst_14 : f32 to vector<16x128xf32>
    %55 = arith.select %50, %53, %54 : vector<16x128xi1>, vector<16x128xf32>
    %c0_15 = arith.constant 0 : index
    %c0_16 = arith.constant 0 : index
    %c0_17 = arith.constant 0 : index
    %56 = vector.load %arg4[%c0_15, %c0_16, %c0_17] : memref<1x16x128xf32, #tpu.memory_space<vmem>>, vector<1x16x128xf32>
    %57 = vector.shape_cast %56 : vector<1x16x128xf32> to vector<16x128xf32>
    %58 = vector.shape_cast %55 : vector<16x128xf32> to vector<1x16x128xf32>
    tpu.vector_store %arg4[%c0_15, %c0_16, %c0_17], %58 {strides = array<i32>} : memref<1x16x128xf32, #tpu.memory_space<vmem>>, vector<1x16x128xf32>,
    return
  }
  func.func @transform_0(%arg0: i32, %arg1: i32, %arg2: memref<4xi32, #tpu.memory_space<smem>>) -> (i32, i32) {
    %c0_i32 = arith.constant 0 : i32
    %c0_i32_0 = arith.constant 0 : i32
    return %arg0, %c0_i32 : i32, i32
  }
  func.func @transform_1(%arg0: i32, %arg1: i32, %arg2: memref<4xi32, #tpu.memory_space<smem>>) -> (i32, i32, i32) {
    %c0_i32 = arith.constant 0 : i32
    %c0_i32_0 = arith.constant 0 : i32
    return %arg1, %arg0, %c0_i32 : i32, i32, i32
  }
}

</mosaic_0001>

<llo_original>
// kernel: tpu_custom_call.1
$region0: #{tpu_custom_call.1}
  #allocation0 [shape = 'u32[]', space=smem, size = 0x4, offset = 0x4, fixed_abs, tag = 'smem constant byte address 0x4 - core index']
  #allocation1 [shape = 'u32[144,128]{1,0:T(1,128)}', space=vmem, size = 0x12000, scoped, tag = 'internal scratch']
  #allocation2 [shape = 's32[1]{0}', space=sflag, size = 0x4, scoped, tag = 'scoped memory for tpu_custom_call.1']
  #allocation3 [shape = 'u8[512]{0}', space=smem, size = 0x200, scoped, tag = 'prefetched SMEM operand 0']
  %s0 = inlined_call_operand.hbm [shape: s32[4], index: 0, kind: input, shape index: {}]
  %s1 = inlined_call_operand.hbm [shape: f32[16,128], index: 1, kind: input, shape index: {}]
  %s2 = inlined_call_operand.hbm [shape: f32[4,16,128], index: 2, kind: output, shape index: {}]
  %s3 = sld [smem:[#allocation0]]
  $region41: #{tpu_custom_call.1} parent=0
    _
  %s5 = ssub.s32 1, %s3
  %s6 = scalar_select 0, %s5, %s3
  %8 = dma.hbm_to_smem %s0, 16, [#allocation3], [#allocation2]
  %9 = dma.done [#allocation2], 16
  %10 = sfence
  $region1: #{tpu_custom_call.1} parent=0
    #allocation4 [shape = 'u8[8192]{0}', space=vmem, size = 0x2000, scoped, tag = 'input window, operand 1, single buffered']
    #allocation5 [shape = 's32[2]{0}', space=sflag, size = 0x8, scoped, tag = 'scoped memory for tpu_custom_call.1']
    #allocation6 [shape = 's32[2]{0}', space=sflag, size = 0x8, scoped, tag = 'scoped memory for tpu_custom_call.1']
    #allocation7 [shape = 'u8[16384]{0}', space=vmem, size = 0x4000, scoped, tag = 'output window, operand 0']
    %11 = vsyncpa [#allocation5], 0
    %12 = vsyncpa [#allocation6], 0
    %s13 = scalar_lea.sflag [#allocation6], 1
    %14 = vsyncpa %s13, 0
    loop: start=0, step=1, limit=6
    $region2: #{tpu_custom_call.1} parent=1 // loop_pre_header
      _
    $region3: #{tpu_custom_call.1} parent=1 // loop_header
      %s16 = sphi 0, %s20
      %p17 = scmp.ge.s32.totalorder %s16, 6
      %s23 = sphi 0, %s35
      %s24 = sphi 0, %s31
      %s25 = sphi 0, %s23
      %s26 = sphi 0, %s24
      %s27 = sphi 0, %s25
      %s28 = sphi 0, %s26
      %s38 = sphi 0, %s40
      %s41 = sphi 0, %s38
      %s42 = sphi 0, %s41
      %s58 = sphi 0, %s42
      %s66 = sphi 0, %s68
      %s69 = sphi 0, %s66
      %s70 = sphi 0, %s69
      %s86 = sphi 0, %s70
    $region4: #{tpu_custom_call.1} parent=1 // loop_header_branch
      %19 = sbr.rel (%p17) target = $region8
    $region5: #{tpu_custom_call.1} parent=1 // loop_body
      %s21 = ssub.s32 %s16, 1
      %s22 = ssub.s32 %s16, 2
      %s29 = sadd.s32 1, %s24
      %p30 = scmp.ge.s32.totalorder %s29, 4
      %s31 = scalar_select %p30, 0, %s29
      %s32 = sadd.s32 1, %s23
      %s33 = scalar_select %p30, %s32, %s23
      %p34 = scmp.ge.s32.totalorder %s33, 1
      %s35 = scalar_select %p34, 0, %s33
      %s36 = ssub.s32 %s23, %s35
      %p37 = scmp.eq.s32.totalorder %s36, 0
      %s39 = sadd.s32 %s38, 1
      %s40 = scalar_select %p37, %s38, %s39
      %p43 = pneg %p37
      %p44 = scmp.eq.s32.totalorder %s16, 3
      %p45 = por %p43, %p44
      %p46 = scmp.ne.s32.totalorder %s38, %s41
      %p47 = scmp.eq.s32.totalorder %s16, 0
      %p48 = por %p46, %p47
      %p49 = scmp.ne.s32.totalorder %s38, %s41
      %p50 = scmp.eq.s32.totalorder %s21, 3
      %p51 = por %p49, %p50
      %p52 = scmp.ne.s32.totalorder %s41, %s42
      %p53 = scmp.eq.s32.totalorder %s21, 0
      %p54 = por %p52, %p53
      %p55 = scmp.ne.s32.totalorder %s41, %s42
      %p56 = scmp.eq.s32.totalorder %s22, 3
      %p57 = por %p55, %p56
      %p59 = scmp.ne.s32.totalorder %s42, %s58
      %p60 = scmp.eq.s32.totalorder %s22, 0
      %p61 = por %p59, %p60
      %s62 = ssub.s32 %s24, %s31
      %s63 = ssub.s32 %s23, %s35
      %s64 = sor.u32 %s62, %s63
      %p65 = scmp.eq.s32.totalorder %s64, 0
      %s67 = sadd.s32 %s66, 1
      %s68 = scalar_select %p65, %s66, %s67
      %p71 = pneg %p65
      %p72 = scmp.eq.s32.totalorder %s16, 3
      %p73 = por %p71, %p72
      %p74 = scmp.ne.s32.totalorder %s66, %s69
      %p75 = scmp.eq.s32.totalorder %s16, 0
      %p76 = por %p74, %p75
      %p77 = scmp.ne.s32.totalorder %s66, %s69
      %p78 = scmp.eq.s32.totalorder %s21, 3
      %p79 = por %p77, %p78
      %p80 = scmp.ne.s32.totalorder %s69, %s70
      %p81 = scmp.eq.s32.totalorder %s21, 0
      %p82 = por %p80, %p81
      %p83 = scmp.ne.s32.totalorder %s69, %s70
      %p84 = scmp.eq.s32.totalorder %s22, 3
      %p85 = por %p83, %p84
      %p87 = scmp.ne.s32.totalorder %s70, %s86
      %p88 = scmp.eq.s32.totalorder %s22, 0
      %p89 = por %p87, %p88
      %p90 = scmp.le.s32.totalorder 1, %s16
      %p91 = scmp.lt.s32.totalorder %s16, 5
      %p92 = pnand %p90, %p91
      %p93 = pneg %p92
      // Predicated region
      $region9: #{tpu_custom_call.1} parent=5 // pred_check
        _
      $region10: #{tpu_custom_call.1} parent=5 // pred_check_branch
        %95 = sbr.rel (%p92) target = $region12
      $region11: #{tpu_custom_call.1} parent=5 // pred_region
        %s96 = ssub.s32 %s16, 1
        // Predicated region
        $region13: #{tpu_custom_call.1} parent=11 // pred_check
          %p97 = pneg %p54
        $region14: #{tpu_custom_call.1} parent=11 // pred_check_branch
          %99 = sbr.rel (%p97) target = $region16
        $region15: #{tpu_custom_call.1} parent=11 // pred_region
          %s100 = smul.u32 2, %s25
          %s102 = ssub.s32 256, 256
          %103 = vsyncadd [#allocation5], %s102
          %s104 = smul.addr %s100, 128
          %s105 = scalar_lea.hbm %s1, %s104
          %s106 = sshll.u32 [#allocation4], 4
          %s107 = int_to_ptr.vmem [resolvable:$true] %s106
          %112 = dma.hbm_to_vmem [thread:$0]  %s105, 256, %s107, [#allocation5], 128, 128, 8
        $region16: #{tpu_custom_call.1} parent=11 // pred_fallthru
          _
      $region12: #{tpu_custom_call.1} parent=5 // pred_fallthru
        _
      %p113 = scmp.lt.s32.totalorder %s16, 4
      // Predicated region
      $region17: #{tpu_custom_call.1} parent=5 // pred_check
        %p114 = pneg %p113
      $region18: #{tpu_custom_call.1} parent=5 // pred_check_branch
        %116 = sbr.rel (%p114) target = $region20
      $region19: #{tpu_custom_call.1} parent=5 // pred_region
        _
      $region20: #{tpu_custom_call.1} parent=5 // pred_fallthru
        _
      %p117 = scmp.le.s32.totalorder 1, %s16
      %p118 = scmp.lt.s32.totalorder %s16, 5
      %p119 = pnand %p117, %p118
      %p120 = pneg %p119
      // Predicated region
      $region21: #{tpu_custom_call.1} parent=5 // pred_check
        _
      $region22: #{tpu_custom_call.1} parent=5 // pred_check_branch
        %122 = sbr.rel (%p119) target = $region24
      $region23: #{tpu_custom_call.1} parent=5 // pred_region
        %s123 = ssub.s32 %s16, 1
        // Predicated region
        $region25: #{tpu_custom_call.1} parent=23 // pred_check
          %p124 = pneg %p54
        $region26: #{tpu_custom_call.1} parent=23 // pred_check_branch
          %126 = sbr.rel (%p124) target = $region28
        $region27: #{tpu_custom_call.1} parent=23 // pred_region
          %127 = dma.done [#allocation5], 256
        $region28: #{tpu_custom_call.1} parent=23 // pred_fallthru
          _
        %p128 = pneg %p54
        %p129 = pneg %p51
        %p130 = pneg %p82
        %p131 = pneg %p79
        %s132 = sand.u32 %s69, 1
        %s133 = scalar_lea.sflag [#allocation6], %s132
        %s134 = sand.u32 %s69, 1
        %s135 = smul.addr %s134, 16
        %s136 = scalar_lea.vmem [#allocation7], %s135
        %s137 = smul.u32 2, %s25
        %s138 = smul.u32 2, %s25
        %s139 = sld [smem:[#allocation3 + %s26]]
        %s140 = sxor.u32 %s139, 2654435769
        %s141 = sshrl.u32 %s140, 16
        %s142 = sxor.u32 %s140, %s141
        %s143 = smul.u32 %s142, 2146121005
        %s144 = sshrl.u32 %s143, 15
        %s145 = sxor.u32 %s143, %s144
        %s146 = smul.u32 %s145, 2221713035
        %s147 = sshrl.u32 %s146, 16
        %s148 = sxor.u32 %s146, %s147
        %v149 = vlaneseq
        %v150 = vshrl.u32 %v149, 7
        %v151 = vadd.s32 %v150, 8
        %v152 = vlaneseq
        %v153 = vand.u32 %v152, 127
        %s154 = smul.u32 %s25, 16
        %v155 = vstv %s154
        %v156 = vadd.s32 %v150, %v155
        %v157 = vadd.s32 %v151, %v155
        %v158 = vmul.u32 %v156, 128
        %v159 = vmul.u32 %v157, 128
        %v160 = vadd.s32 %v158, %v153
        %v161 = vadd.s32 %v159, %v153
        %v162 = vstv %s148
        %v163 = vxor.u32 %v160, %v162
        %v164 = vxor.u32 %v161, %v162
        %v165 = vshrl.u32 %v163, 16
        %v166 = vshrl.u32 %v164, 16
        %v167 = vxor.u32 %v163, %v165
        %v168 = vxor.u32 %v164, %v166
        %v169 = vmul.u32 %v167, 2146121005
        %v170 = vmul.u32 %v168, 2146121005
        %v171 = vshrl.u32 %v169, 15
        %v172 = vshrl.u32 %v170, 15
        %v173 = vxor.u32 %v169, %v171
        %v174 = vxor.u32 %v170, %v172
        %v175 = vmul.u32 %v173, 2221713035
        %v176 = vmul.u32 %v174, 2221713035
        %v177 = vshrl.u32 %v175, 16
        %v178 = vshrl.u32 %v176, 16
        %v179 = vxor.u32 %v175, %v177
        %v180 = vxor.u32 %v176, %v178
        %v181 = vadd.s32 %v179, 2654435769
        %v182 = vadd.s32 %v180, 2654435769
        %v183 = vshrl.u32 %v181, 16
        %v184 = vshrl.u32 %v182, 16
        %v185 = vxor.u32 %v181, %v183
        %v186 = vxor.u32 %v182, %v184
        %v187 = vmul.u32 %v185, 2146121005
        %v188 = vmul.u32 %v186, 2146121005
        %v189 = vshrl.u32 %v187, 15
        %v190 = vshrl.u32 %v188, 15
        %v191 = vxor.u32 %v187, %v189
        %v192 = vxor.u32 %v188, %v190
        %v193 = vmul.u32 %v191, 2221713035
        %v194 = vmul.u32 %v192, 2221713035
        %v195 = vshrl.u32 %v193, 16
        %v196 = vshrl.u32 %v194, 16
        %v197 = vxor.u32 %v193, %v195
        %v198 = vxor.u32 %v194, %v196
        %vm199 = vcmp.ge.u32.totalorder %v197, 429496730
        %vm200 = vcmp.ge.u32.totalorder %v198, 429496730
        %v201 = vld [vmem:[#allocation4] sm:$0xff]
        %v202 = vld [vmem:[#allocation4 + $0x8] sm:$0xff]
        %v203 = vmul.f32 %v201, 1.1111112
        %v204 = vmul.f32 %v202, 1.1111112
        %v205 = vsel %vm199, %v203, 0.0
        %v206 = vsel %vm200, %v204, 0.0
        %207 = vst [vmem:[%s136] sm:$0xff] %v205
        %208 = vst [vmem:[%s136 + $0x8] sm:$0xff] %v206
        %s209 = sand.u32 %s69, 1
        %s210 = scalar_lea.sflag [#allocation6], %s209
        %s211 = sand.u32 %s69, 1
        %s212 = smul.addr %s211, 16
        %s213 = scalar_lea.vmem [#allocation7], %s212
        // Predicated region
        $region29: #{tpu_custom_call.1} parent=23 // pred_check
          %p214 = pneg %p79
        $region30: #{tpu_custom_call.1} parent=23 // pred_check_branch
          %216 = sbr.rel (%p214) target = $region32
        $region31: #{tpu_custom_call.1} parent=23 // pred_region
          %s217 = smul.u32 2, %s25
          %s219 = ssub.s32 256, 256
          %220 = vsyncadd %s210, %s219
          %s221 = smul.addr %s26, 2
          %s222 = sadd.s32 %s217, %s221
          %s223 = smul.addr %s222, 128
          %s224 = scalar_lea.hbm %s2, %s223
          %s225 = sshll.u32 %s213, 4
          %s226 = int_to_ptr.vmem [resolvable:$true] %s225
          %231 = dma.vmem_to_hbm [thread:$0]  %s226, 256, %s224, %s210, 128, 128, 8
        $region32: #{tpu_custom_call.1} parent=23 // pred_fallthru
          _
      $region24: #{tpu_custom_call.1} parent=5 // pred_fallthru
        _
      %p232 = scmp.le.s32.totalorder 2, %s16
      // Predicated region
      $region33: #{tpu_custom_call.1} parent=5 // pred_check
        %p233 = pneg %p232
      $region34: #{tpu_custom_call.1} parent=5 // pred_check_branch
        %235 = sbr.rel (%p233) target = $region36
      $region35: #{tpu_custom_call.1} parent=5 // pred_region
        %s236 = ssub.s32 %s16, 2
        // Predicated region
        $region37: #{tpu_custom_call.1} parent=35 // pred_check
          %p237 = pneg %p85
        $region38: #{tpu_custom_call.1} parent=35 // pred_check_branch
          %239 = sbr.rel (%p237) target = $region40
        $region39: #{tpu_custom_call.1} parent=35 // pred_region
          %s240 = sand.u32 %s70, 1
          %s241 = scalar_lea.sflag [#allocation6], %s240
          %s242 = sand.u32 %s70, 1
          %s243 = smul.addr %s242, 16
          %s244 = scalar_lea.vmem [#allocation7], %s243
          %245 = dma.done %s241, 256
        $region40: #{tpu_custom_call.1} parent=35 // pred_fallthru
          _
      $region36: #{tpu_custom_call.1} parent=5 // pred_fallthru
        _
    $region6: #{tpu_custom_call.1} parent=1 // loop_footer
      %s20 = sadd.s32 1, %s16
    $region7: #{tpu_custom_call.1} parent=1 // loop_footer_branch
      %15 = sbr.rel target = $region3
    $region8: #{tpu_custom_call.1} parent=1 // loop_exit
      _
    %246 = vsyncpa [#allocation5], 1
    %s247 = scalar_lea.sflag [#allocation5], 1
    %248 = vsyncpa %s247, 1
    %249 = vsyncpa [#allocation6], 1
    %s250 = scalar_lea.sflag [#allocation6], 1
    %251 = vsyncpa %s250, 1

</llo_original>
